<compile_context>
chip_gen: v7x
topology: tpu7x:2x2x1
jax: 0.10.0
libtpu: 0.0.40
codegen_flags: <defaults>
</compile_context>

<pallas_src>
import jax
import jax.numpy as jnp
from jax.experimental import pallas as pl
from jax.experimental.pallas import tpu as pltpu


def _awl_kernel(p_ref, l_ref, out_ref, dp_ref, dl_ref):
    # p_ref, l_ref:   (1, num) f32 in VMEM
    # out_ref:        (1, 1)   f32 in SMEM   (scalar loss)
    # dp_ref, dl_ref: (1, num) f32 in VMEM   (per-element grads, unscaled by g)
    p = p_ref[...]                                   # (1, num)
    l = l_ref[...]                                   # (1, num)
    p2 = p * p
    inv_p2 = pl.reciprocal(p2, approx=False)         # EUP
    half_inv_p2 = 0.5 * inv_p2
    term = half_inv_p2 * l + jnp.log1p(p2)           # == 0.5/p^2 * l + log(1+p^2)
    out_ref[0, 0] = jnp.sum(term)                    # lane reduce -> scalar -> SMEM

    # Analytic per-element gradients (backward just scales these by g):
    #   dL/dl_i = 0.5 / p_i^2
    #   dL/dp_i = -l_i / p_i^3 + 2 p_i / (1 + p_i^2)
    dl_ref[...] = half_inv_p2
    dp_ref[...] = (-l * inv_p2 * inv_p2 * p
                   + 2.0 * p * pl.reciprocal(1.0 + p2, approx=False))


def _awl_pallas(params: jax.Array, losses: jax.Array):
    """params: (num,) f32, losses: (num,) f32 -> (scalar, dparams (num,), dlosses (num,))."""
    num = params.shape[0]
    assert losses.shape == (num,)
    p2d = params.astype(jnp.float32).reshape(1, num)
    l2d = losses.astype(jnp.float32).reshape(1, num)

    out, dp, dl = pl.pallas_call(
        _awl_kernel,
        out_shape=(
            jax.ShapeDtypeStruct((1, 1), jnp.float32),     # scalar loss
            jax.ShapeDtypeStruct((1, num), jnp.float32),   # d/dparams (unscaled)
            jax.ShapeDtypeStruct((1, num), jnp.float32),   # d/dlosses (unscaled)
        ),
        in_specs=[
            pl.BlockSpec(memory_space=pltpu.MemorySpace.VMEM),
            pl.BlockSpec(memory_space=pltpu.MemorySpace.VMEM),
        ],
        out_specs=(
            pl.BlockSpec(memory_space=pltpu.MemorySpace.SMEM),
            pl.BlockSpec(memory_space=pltpu.MemorySpace.VMEM),
            pl.BlockSpec(memory_space=pltpu.MemorySpace.VMEM),
        ),
        cost_estimate=pl.CostEstimate(
            flops=8 * num, transcendentals=3 * num, bytes_accessed=3 * 4 * num + 4
        ),
    )(p2d, l2d)
    return out[0, 0], dp.reshape(num), dl.reshape(num)


# --- differentiable wrapper (the PyTorch params are learnable) -------------------
@jax.custom_vjp
def automatic_weighted_loss(params: jax.Array, losses: jax.Array) -> jax.Array:
    out, _, _ = _awl_pallas(params, losses)
    return out


def _awl_fwd(params, losses):
    # Forward and per-element grads come out of the SAME Pallas call.
    out, dp, dl = _awl_pallas(params, losses)
    return out, (dp, dl)


def _awl_bwd(residuals, g):
    dp, dl = residuals
    return g * dp, g * dl


automatic_weighted_loss.defvjp(_awl_fwd, _awl_bwd)


@jax.jit
def _awl_apply(params, *losses):
    # Stack the per-task scalar losses inside the jit so XLA fuses the marshalling.
    losses_arr = jnp.stack(
        [jnp.asarray(l, dtype=jnp.float32).reshape(()) for l in losses]
    )
    return automatic_weighted_loss(params, losses_arr)


class AutomaticWeightedLossPallas:
    """Mirror of the PyTorch module: holds `params` (init = ones(num))."""

    def __init__(self, num: int = 2):
        self.num = num
        self.params = jnp.ones((num,), dtype=jnp.float32)  # matches torch.ones(num)

    def __call__(self, *losses):
        return _awl_apply(self.params, *losses)


def _reference(params, losses):
    p2 = params.astype(jnp.float32) ** 2
    return jnp.sum(0.5 / p2 * losses.astype(jnp.float32) + jnp.log(1.0 + p2))


if __name__ == "__main__":
    num = 2
    key = jax.random.PRNGKey(0)
    k1, k2 = jax.random.split(key)

    # Two synthetic scalar task losses (as the PyTorch example: awl(loss1, loss2))
    loss1 = jax.random.uniform(k1, (), dtype=jnp.float32) * 2.0 + 0.5
    loss2 = jax.random.uniform(k2, (), dtype=jnp.float32) * 2.0 + 0.5

    awl = AutomaticWeightedLossPallas(num)
    result = jax.block_until_ready(awl(loss1, loss2))

    losses_arr = jnp.stack([loss1, loss2])
    expected = _reference(awl.params, losses_arr)
    assert jnp.allclose(result, expected, rtol=1e-5, atol=1e-5), (result, expected)

    # Check the fused in-kernel gradients against autodiff of the pure-JAX reference.
    g_pallas = jax.grad(automatic_weighted_loss, argnums=(0, 1))(awl.params, losses_arr)
    g_ref = jax.grad(_reference, argnums=(0, 1))(awl.params, losses_arr)
    for gp, gr in zip(g_pallas, g_ref):
        assert jnp.allclose(gp, gr, rtol=1e-5, atol=1e-5), (gp, gr)

    # Also exercise a non-unit cotangent through value_and_grad of a scaled loss.
    v, g = jax.value_and_grad(lambda p: 3.0 * automatic_weighted_loss(p, losses_arr))(awl.params)
    v_ref, g_ref2 = jax.value_and_grad(lambda p: 3.0 * _reference(p, losses_arr))(awl.params)
    assert jnp.allclose(v, v_ref, rtol=1e-5, atol=1e-5), (v, v_ref)
    assert jnp.allclose(g, g_ref2, rtol=1e-5, atol=1e-5), (g, g_ref2)

    jax.block_until_ready((result, g_pallas, v, g))
    print("KERNEL_OK")
</pallas_src>

<mosaic_0001>
module attributes {stable_mosaic.version = 11 : i64} {
  func.func @_awl_kernel(%arg0: memref<1x2xf32, #tpu.memory_space<vmem>>, %arg1: memref<1x2xf32, #tpu.memory_space<vmem>>, %arg2: memref<1x1xf32, #tpu.memory_space<smem>>, %arg3: memref<1x2xf32, #tpu.memory_space<vmem>>, %arg4: memref<1x2xf32, #tpu.memory_space<vmem>>) attributes {dimension_semantics = [], scalar_prefetch = 0 : i64, scratch_operands = 0 : i64, tpu.core_type = #tpu.core_type<tc>} {
    %c0 = arith.constant 0 : index
    %c0_0 = arith.constant 0 : index
    %0 = vector.load %arg0[%c0, %c0_0] : memref<1x2xf32, #tpu.memory_space<vmem>>, vector<1x2xf32>
    %c0_1 = arith.constant 0 : index
    %c0_2 = arith.constant 0 : index
    %1 = vector.load %arg1[%c0_1, %c0_2] : memref<1x2xf32, #tpu.memory_space<vmem>>, vector<1x2xf32>
    %2 = arith.mulf %0, %0 : vector<1x2xf32>
    %3 = tpu.reciprocal %2 : vector<1x2xf32> -> vector<1x2xf32>
    %cst = arith.constant 5.000000e-01 : f32
    %4 = vector.broadcast %cst : f32 to vector<1x2xf32>
    %5 = arith.mulf %4, %3 : vector<1x2xf32>
    %6 = arith.mulf %5, %1 : vector<1x2xf32>
    %7 = math.log1p %2 : vector<1x2xf32>
    %8 = arith.addf %6, %7 : vector<1x2xf32>
    %9 = vector.shape_cast %8 : vector<1x2xf32> to vector<1x1x2xf32>
    %cst_3 = arith.constant dense<0.000000e+00> : vector<1xf32>
    %10 = vector.multi_reduction <add>, %9, %cst_3 [1, 2] : vector<1x1x2xf32> to vector<1xf32>
    %11 = vector.shape_cast %10 : vector<1xf32> to vector<1x1x1xf32>
    %12 = vector.extract %11[0, 0, 0] : f32 from vector<1x1x1xf32>
    %c0_4 = arith.constant 0 : index
    %c0_5 = arith.constant 0 : index
    %13 = memref.load %arg2[%c0_4, %c0_5] : memref<1x1xf32, #tpu.memory_space<smem>>
    memref.store %12, %arg2[%c0_4, %c0_5] : memref<1x1xf32, #tpu.memory_space<smem>>
    %c0_6 = arith.constant 0 : index
    %c0_7 = arith.constant 0 : index
    %14 = vector.load %arg4[%c0_6, %c0_7] : memref<1x2xf32, #tpu.memory_space<vmem>>, vector<1x2xf32>
    tpu.vector_store %arg4[%c0_6, %c0_7], %5 {strides = array<i32>} : memref<1x2xf32, #tpu.memory_space<vmem>>, vector<1x2xf32>,
    %cst_8 = arith.constant 0.000000e+00 : f32
    %15 = vector.broadcast %cst_8 : f32 to vector<1x2xf32>
    %16 = arith.subf %15, %1 : vector<1x2xf32>
    %17 = arith.mulf %16, %3 : vector<1x2xf32>
    %18 = arith.mulf %17, %3 : vector<1x2xf32>
    %19 = arith.mulf %18, %0 : vector<1x2xf32>
    %cst_9 = arith.constant 2.000000e+00 : f32
    %20 = vector.broadcast %cst_9 : f32 to vector<1x2xf32>
    %21 = arith.mulf %20, %0 : vector<1x2xf32>
    %cst_10 = arith.constant 1.000000e+00 : f32
    %22 = vector.broadcast %cst_10 : f32 to vector<1x2xf32>
    %23 = arith.addf %22, %2 : vector<1x2xf32>
    %24 = tpu.reciprocal %23 : vector<1x2xf32> -> vector<1x2xf32>
    %25 = arith.mulf %21, %24 : vector<1x2xf32>
    %26 = arith.addf %19, %25 : vector<1x2xf32>
    %c0_11 = arith.constant 0 : index
    %c0_12 = arith.constant 0 : index
    %27 = vector.load %arg3[%c0_11, %c0_12] : memref<1x2xf32, #tpu.memory_space<vmem>>, vector<1x2xf32>
    tpu.vector_store %arg3[%c0_11, %c0_12], %26 {strides = array<i32>} : memref<1x2xf32, #tpu.memory_space<vmem>>, vector<1x2xf32>,
    return
  }
}

</mosaic_0001>

<llo_original>
// kernel: _awl_apply.1
$region0: #{_awl_apply.1}
  #allocation0 [shape = 'u32[]', space=smem, size = 0x4, offset = 0x4, fixed_abs, tag = 'smem constant byte address 0x4 - core index']
  #allocation1 [shape = 'u32[144,128]{1,0:T(1,128)}', space=vmem, size = 0x12000, scoped, tag = 'internal scratch']
  %s0 = inlined_call_operand.vmem [shape: f32[1,2], index: 0, kind: input, shape index: {}]
  %s1 = inlined_call_operand.vmem [shape: f32[1,2], index: 1, kind: input, shape index: {}]
  %s2 = inlined_call_operand.hbm [shape: f32[1,1], index: 2, kind: output, shape index: {0}]
  %s3 = inlined_call_operand.hbm [shape: f32[1,2], index: 3, kind: output, shape index: {1}]
  %s4 = inlined_call_operand.hbm [shape: f32[1,2], index: 4, kind: output, shape index: {2}]
  %5 = xla_tuple %s2, %s3, %s4
  %s6 = sld [smem:[#allocation0]]
  $region34: #{_awl_apply.1} parent=0
    _
  %s8 = ssub.s32 1, %s6
  %s9 = scalar_select 0, %s8, %s6
  $region1: #{_awl_apply.1} parent=0
    #allocation2 [shape = 'u8[512]{0}', space=smem, size = 0x200, scoped, tag = 'output window, operand 0, single buffered']
    #allocation3 [shape = 's32[1]{0}', space=sflag, size = 0x4, scoped, tag = 'scoped memory for _awl_apply.1']
    #allocation4 [shape = 's32[1]{0}', space=sflag, size = 0x4, scoped, tag = 'scoped memory for _awl_apply.1']
    #allocation5 [shape = 'u8[512]{0}', space=vmem, size = 0x400, scoped, tag = 'output window, operand 1, single buffered']
    #allocation6 [shape = 'u8[512]{0}', space=vmem, size = 0x400, scoped, tag = 'output window, operand 2, single buffered']
    #allocation7 [shape = 's32[1]{0}', space=sflag, size = 0x4, scoped, tag = 'scoped memory for _awl_apply.1']
    %10 = vsyncpa [#allocation4], 0
    %11 = vsyncpa [#allocation3], 0
    %12 = vsyncpa [#allocation7], 0
    // Predicated region
    $region2: #{_awl_apply.1} parent=1 // pred_check
      _
    $region3: #{_awl_apply.1} parent=1 // pred_check_branch
      %14 = sbr.rel (0) target = $region5
    $region4: #{_awl_apply.1} parent=1 // pred_region
      _
    $region5: #{_awl_apply.1} parent=1 // pred_fallthru
      _
    // Predicated region
    $region6: #{_awl_apply.1} parent=1 // pred_check
      _
    $region7: #{_awl_apply.1} parent=1 // pred_check_branch
      %16 = sbr.rel (0) target = $region9
    $region8: #{_awl_apply.1} parent=1 // pred_region
      _
    $region9: #{_awl_apply.1} parent=1 // pred_fallthru
      _
    %v17 = vld [vmem:[%s0] sm:$0x1]
    %v18 = vld [vmem:[%s1] sm:$0x1]
    %v19 = vmul.f32 %v17, %v17
    %v20 = vrcp.pop %v19
    %v21 = vmul.f32 %v20, 0.5
    %v22 = vmul.f32 %v21, %v18
    %v23 = vadd.f32 %v19, 1.0
    %v24 = vlog2.pop %v23
    %v25 = vmul.f32 %v24, 0.6931472
    %v26 = vmul.f32 -0.5, %v19
    %v27 = vadd.f32 %v26, 1.0
    %v28 = vmul.f32 %v27, %v19
    %v29 = vand.u32 2147483647, %v19
    %vm30 = vcmp.lt.f32.partialorder %v29, 0.0004427343
    %v31 = vsel %vm30, %v28, %v25
    %v32 = vadd.f32 %v22, %v31
    %vm33 = vcmask 8192
    %v34 = vsel %vm33, %v32, 0.0
    %35 = vadd.xlane.f32.xlu0 %v34
    %v36 = vpop.xlane.xlu0 %35
    %v37 = vrot.slane %v36, 4
    %v38 = vadd.f32 %v36, %v37
    %v39 = vrot.slane %v38, 2
    %v40 = vadd.f32 %v38, %v39
    %v41 = vrot.slane %v40, 1
    %v42 = vadd.f32 %v40, %v41
    %s43 = vtos %v42
    %s44 = scalar_lea.smem [#allocation2], 0
    %45 = sst [smem:[%s44]] %s43
    %46 = vst.msk [vmem:[#allocation6] sm:$0x1] %vm33, %v21
    %v47 = vsub.f32 0.0, %v18
    %v48 = vmul.f32 %v47, %v20
    %v49 = vmul.f32 %v48, %v20
    %v50 = vmul.f32 %v49, %v17
    %v51 = vmul.f32 %v17, 2.0
    %v52 = vadd.f32 %v19, 1.0
    %v53 = vrcp.pop %v52
    %v54 = vmul.f32 %v51, %v53
    %v55 = vadd.f32 %v50, %v54
    %56 = vst.msk [vmem:[#allocation5] sm:$0x1] %vm33, %v55
    // Predicated region
    $region10: #{_awl_apply.1} parent=1 // pred_check
      _
    $region11: #{_awl_apply.1} parent=1 // pred_check_branch
      %58 = sbr.rel (0) target = $region13
    $region12: #{_awl_apply.1} parent=1 // pred_region
      %s60 = ssub.s32 16, 16
      %61 = vsyncadd [#allocation4], %s60
      %64 = dma.smem_to_hbm [#allocation2], 16, %s2, [#allocation4]
    $region13: #{_awl_apply.1} parent=1 // pred_fallthru
      _
    // Predicated region
    $region14: #{_awl_apply.1} parent=1 // pred_check
      _
    $region15: #{_awl_apply.1} parent=1 // pred_check_branch
      %66 = sbr.rel (0) target = $region17
    $region16: #{_awl_apply.1} parent=1 // pred_region
      %s68 = ssub.s32 16, 16
      %69 = vsyncadd [#allocation3], %s68
      %s71 = sshll.u32 [#allocation5], 4
      %s72 = int_to_ptr.vmem [resolvable:$true] %s71
      %74 = dma.vmem_to_hbm [thread:$0]  %s72, 16, %s3, [#allocation3]
    $region17: #{_awl_apply.1} parent=1 // pred_fallthru
      _
    // Predicated region
    $region18: #{_awl_apply.1} parent=1 // pred_check
      _
    $region19: #{_awl_apply.1} parent=1 // pred_check_branch
      %76 = sbr.rel (0) target = $region21
    $region20: #{_awl_apply.1} parent=1 // pred_region
      %s78 = ssub.s32 16, 16
      %79 = vsyncadd [#allocation7], %s78
      %s81 = sshll.u32 [#allocation6], 4
      %s82 = int_to_ptr.vmem [resolvable:$true] %s81
      %84 = dma.vmem_to_hbm [thread:$0]  %s82, 16, %s4, [#allocation7]
    $region21: #{_awl_apply.1} parent=1 // pred_fallthru
      _
    // Predicated region
    $region22: #{_awl_apply.1} parent=1 // pred_check
      _
    $region23: #{_awl_apply.1} parent=1 // pred_check_branch
      %86 = sbr.rel (0) target = $region25
    $region24: #{_awl_apply.1} parent=1 // pred_region
      %87 = dma.done [#allocation4], 16
    $region25: #{_awl_apply.1} parent=1 // pred_fallthru
      _
    // Predicated region
    $region26: #{_awl_apply.1} parent=1 // pred_check
      _
    $region27: #{_awl_apply.1} parent=1 // pred_check_branch
      %89 = sbr.rel (0) target = $region29
    $region28: #{_awl_apply.1} parent=1 // pred_region
      %90 = dma.done [#allocation3], 16
    $region29: #{_awl_apply.1} parent=1 // pred_fallthru
      _
    // Predicated region
    $region30: #{_awl_apply.1} parent=1 // pred_check
      _
    $region31: #{_awl_apply.1} parent=1 // pred_check_branch
      %92 = sbr.rel (0) target = $region33
    $region32: #{_awl_apply.1} parent=1 // pred_region
      %93 = dma.done [#allocation7], 16
    $region33: #{_awl_apply.1} parent=1 // pred_fallthru
      _
    %94 = sfence
    %95 = vsyncpa [#allocation3], 1
    %96 = vsyncpa [#allocation7], 1
    %97 = vsyncpa [#allocation4], 1

</llo_original>
